<compile_context>
chip_gen: v5e
topology: v5e:2x2
jax: 0.10.0
libtpu: 0.0.40
codegen_flags: <defaults>
</compile_context>

<pallas_src>
import functools

import jax
import jax.numpy as jnp
from jax.experimental import pallas as pl
from jax.experimental.pallas import tpu as pltpu


def _round_up(x, m):
    return ((x + m - 1) // m) * m


def _actor_kernel(max_action, compute_dtype,
                  s_ref, w1_ref, b1_ref, w2_ref, b2_ref, w3_ref, b3_ref,
                  o_ref):
    # Layer 1: relu(state @ W1 + b1)   -> (TB, 256)
    x = s_ref[...].astype(compute_dtype)
    a = jnp.dot(x, w1_ref[...], preferred_element_type=jnp.float32)
    a = jnp.maximum(a + b1_ref[...], 0.0)
    # Layer 2: relu(a @ W2 + b2)       -> (TB, 256)
    a = jnp.dot(a.astype(compute_dtype), w2_ref[...],
                preferred_element_type=jnp.float32)
    a = jnp.maximum(a + b2_ref[...], 0.0)
    # Layer 3: max_action * tanh(a @ W3 + b3) -> (TB, A_pad)
    a = jnp.dot(a.astype(compute_dtype), w3_ref[...],
                preferred_element_type=jnp.float32)
    o_ref[...] = (max_action * jnp.tanh(a + b3_ref[...])).astype(o_ref.dtype)


def actor_forward(state, params, max_action, *,
                  compute_dtype=jnp.bfloat16, block_b=256):
    """Pallas TPU forward for the TD3-BC Actor MLP.

    state: (B, state_dim) float32
    params: dict with w1 (S,256), b1 (1,256), w2 (256,256), b2 (1,256),
            w3 (256,A), b3 (1,A)  (all float32)
    compute_dtype: dtype fed to the MXU (accumulation is always f32).
    """
    w1, b1 = params["w1"], params["b1"]
    w2, b2 = params["w2"], params["b2"]
    w3, b3 = params["w3"], params["b3"]

    B, S = state.shape
    H = w1.shape[1]
    A = w3.shape[1]

    # Lane-pad the output feature dim to a multiple of 128 (unmasked stores,
    # fuller MXU N dim). Padded columns are sliced off in the wrapper.
    A_pad = _round_up(A, 128)
    if A_pad != A:
        w3 = jnp.pad(w3, ((0, 0), (0, A_pad - A)))
        b3 = jnp.pad(b3, ((0, 0), (0, A_pad - A)))

    # Weights feed the MXU in compute_dtype; biases stay f32 (VPU math is f32).
    w1c = w1.astype(compute_dtype)
    w2c = w2.astype(compute_dtype)
    w3c = w3.astype(compute_dtype)
    b1f = b1.astype(jnp.float32)
    b2f = b2.astype(jnp.float32)
    b3f = b3.astype(jnp.float32)

    # Batch tile: fill the MXU M dim at large B, but don't over-pad tiny B.
    TB = min(block_b, _round_up(B, 8))
    B_pad = _round_up(B, TB)
    if B_pad != B:
        state = jnp.pad(state, ((0, B_pad - B), (0, 0)))
    grid = (B_pad // TB,)

    kernel = functools.partial(_actor_kernel, float(max_action), compute_dtype)

    itemsize = jnp.dtype(compute_dtype).itemsize
    cost = pl.CostEstimate(
        flops=int(2 * B_pad * (S * H + H * H + H * A_pad)),
        transcendentals=int(B_pad * A_pad),
        bytes_accessed=int(
            B_pad * S * 4 + B_pad * A_pad * 4
            + (S * H + H * H + H * A_pad) * itemsize
            + (2 * H + A_pad) * 4),
    )

    out = pl.pallas_call(
        kernel,
        out_shape=jax.ShapeDtypeStruct((B_pad, A_pad), jnp.float32),
        grid_spec=pltpu.PrefetchScalarGridSpec(
            num_scalar_prefetch=0,
            grid=grid,
            in_specs=[
                pl.BlockSpec((TB, S), lambda i: (i, 0)),        # state tile
                pl.BlockSpec((S, H), lambda i: (0, 0)),         # W1 (resident)
                pl.BlockSpec((1, H), lambda i: (0, 0)),         # b1
                pl.BlockSpec((H, H), lambda i: (0, 0)),         # W2
                pl.BlockSpec((1, H), lambda i: (0, 0)),         # b2
                pl.BlockSpec((H, A_pad), lambda i: (0, 0)),     # W3 (padded)
                pl.BlockSpec((1, A_pad), lambda i: (0, 0)),     # b3 (padded)
            ],
            out_specs=pl.BlockSpec((TB, A_pad), lambda i: (i, 0)),
        ),
        compiler_params=pltpu.CompilerParams(
            dimension_semantics=("parallel",)),   # v7x: shard batch over 2 TCs
        cost_estimate=cost,
    )(state, w1c, b1f, w2c, b2f, w3c, b3f)

    return out[:B, :A]


def init_actor_params(key, state_dim, action_dim, hidden=256):
    """Deterministic synthetic init (PyTorch-Linear-style uniform bounds)."""
    ks = jax.random.split(key, 6)

    def linear(kw, kb, fan_in, fan_out):
        bound = 1.0 / jnp.sqrt(fan_in)
        w = jax.random.uniform(kw, (fan_in, fan_out), jnp.float32, -bound, bound)
        b = jax.random.uniform(kb, (1, fan_out), jnp.float32, -bound, bound)
        return w, b

    w1, b1 = linear(ks[0], ks[1], state_dim, hidden)
    w2, b2 = linear(ks[2], ks[3], hidden, hidden)
    w3, b3 = linear(ks[4], ks[5], hidden, action_dim)
    return {"w1": w1, "b1": b1, "w2": w2, "b2": b2, "w3": w3, "b3": b3}


def actor_reference(state, params, max_action):
    a = jnp.maximum(state @ params["w1"] + params["b1"], 0.0)
    a = jnp.maximum(a @ params["w2"] + params["b2"], 0.0)
    return max_action * jnp.tanh(a @ params["w3"] + params["b3"])


if __name__ == "__main__":
    key = jax.random.PRNGKey(0)
    k_state, k_params = jax.random.split(key)

    batch = 8
    state_dim = 16
    action_dim = 8
    max_action = 2.0

    state = jax.random.normal(k_state, (batch, state_dim), jnp.float32)
    params = init_actor_params(k_params, state_dim, action_dim)

    ref = actor_reference(state, params, max_action)

    # Exact-path check (f32 MXU inputs) — tight tolerance.
    out_f32 = jax.block_until_ready(
        actor_forward(state, params, max_action, compute_dtype=jnp.float32))
    assert out_f32.shape == (batch, action_dim)
    assert jnp.allclose(out_f32, ref, atol=1e-5, rtol=1e-5)

    # Default fast path (bf16 MXU inputs, f32 accumulation) — looser tolerance.
    out_bf16 = jax.block_until_ready(actor_forward(state, params, max_action))
    assert out_bf16.shape == (batch, action_dim)
    assert jnp.allclose(out_bf16, ref, atol=5e-2, rtol=5e-2)

    print("KERNEL_OK")
</pallas_src>

<mosaic_0001>
module attributes {stable_mosaic.version = 11 : i64} {
  func.func @_actor_kernel(%arg0: i32, %arg1: memref<8x16xf32, #tpu.memory_space<vmem>>, %arg2: memref<16x256xf32, #tpu.memory_space<vmem>>, %arg3: memref<1x256xf32, #tpu.memory_space<vmem>>, %arg4: memref<256x256xf32, #tpu.memory_space<vmem>>, %arg5: memref<1x256xf32, #tpu.memory_space<vmem>>, %arg6: memref<256x128xf32, #tpu.memory_space<vmem>>, %arg7: memref<1x128xf32, #tpu.memory_space<vmem>>, %arg8: memref<8x128xf32, #tpu.memory_space<vmem>>) attributes {dimension_semantics = [#tpu.dimension_semantics<parallel>], iteration_bounds = array<i64: 1>, scalar_prefetch = 0 : i64, scratch_operands = 0 : i64, tpu.core_type = #tpu.core_type<tc>, window_params = [{transform_indices = @transform_0, window_bounds = array<i64: 8, 16>}, {pipeline_mode = #tpu.pipeline_mode<synchronous>, transform_indices = @transform_1, window_bounds = array<i64: 16, 256>}, {pipeline_mode = #tpu.pipeline_mode<synchronous>, transform_indices = @transform_2, window_bounds = array<i64: 1, 256>}, {pipeline_mode = #tpu.pipeline_mode<synchronous>, transform_indices = @transform_3, window_bounds = array<i64: 256, 256>}, {pipeline_mode = #tpu.pipeline_mode<synchronous>, transform_indices = @transform_4, window_bounds = array<i64: 1, 256>}, {pipeline_mode = #tpu.pipeline_mode<synchronous>, transform_indices = @transform_5, window_bounds = array<i64: 256, 128>}, {pipeline_mode = #tpu.pipeline_mode<synchronous>, transform_indices = @transform_6, window_bounds = array<i64: 1, 128>}, {transform_indices = @transform_7, window_bounds = array<i64: 8, 128>}]} {
    %c0 = arith.constant 0 : index
    %c0_0 = arith.constant 0 : index
    %0 = vector.load %arg1[%c0, %c0_0] : memref<8x16xf32, #tpu.memory_space<vmem>>, vector<8x16xf32>
    %c0_1 = arith.constant 0 : index
    %c0_2 = arith.constant 0 : index
    %1 = vector.load %arg2[%c0_1, %c0_2] : memref<16x256xf32, #tpu.memory_space<vmem>>, vector<16x256xf32>
    %cst = arith.constant dense<0.000000e+00> : vector<8x256xf32>
    %2 = tpu.matmul %0, %1, %cst {dimension_numbers = #tpu.dot_dimension_numbers<[1], [0], [0], [1], [0, 0, 1, 1], [], []>} : vector<8x16xf32>, vector<16x256xf32>, vector<8x256xf32> -> vector<8x256xf32>
    %c0_3 = arith.constant 0 : index
    %c0_4 = arith.constant 0 : index
    %3 = vector.load %arg3[%c0_3, %c0_4] : memref<1x256xf32, #tpu.memory_space<vmem>>, vector<1x256xf32>
    %4 = vector.broadcast %3 : vector<1x256xf32> to vector<8x256xf32>
    %5 = arith.addf %2, %4 : vector<8x256xf32>
    %cst_5 = arith.constant 0.000000e+00 : f32
    %6 = vector.broadcast %cst_5 : f32 to vector<8x256xf32>
    %7 = arith.maximumf %5, %6 : vector<8x256xf32>
    %c0_6 = arith.constant 0 : index
    %c0_7 = arith.constant 0 : index
    %8 = vector.load %arg4[%c0_6, %c0_7] : memref<256x256xf32, #tpu.memory_space<vmem>>, vector<256x256xf32>
    %cst_8 = arith.constant dense<0.000000e+00> : vector<8x256xf32>
    %9 = tpu.matmul %7, %8, %cst_8 {dimension_numbers = #tpu.dot_dimension_numbers<[1], [0], [0], [1], [0, 0, 1, 1], [], []>} : vector<8x256xf32>, vector<256x256xf32>, vector<8x256xf32> -> vector<8x256xf32>
    %c0_9 = arith.constant 0 : index
    %c0_10 = arith.constant 0 : index
    %10 = vector.load %arg5[%c0_9, %c0_10] : memref<1x256xf32, #tpu.memory_space<vmem>>, vector<1x256xf32>
    %11 = vector.broadcast %10 : vector<1x256xf32> to vector<8x256xf32>
    %12 = arith.addf %9, %11 : vector<8x256xf32>
    %cst_11 = arith.constant 0.000000e+00 : f32
    %13 = vector.broadcast %cst_11 : f32 to vector<8x256xf32>
    %14 = arith.maximumf %12, %13 : vector<8x256xf32>
    %c0_12 = arith.constant 0 : index
    %c0_13 = arith.constant 0 : index
    %15 = vector.load %arg6[%c0_12, %c0_13] : memref<256x128xf32, #tpu.memory_space<vmem>>, vector<256x128xf32>
    %cst_14 = arith.constant dense<0.000000e+00> : vector<8x128xf32>
    %16 = tpu.matmul %14, %15, %cst_14 {dimension_numbers = #tpu.dot_dimension_numbers<[1], [0], [0], [1], [0, 0, 1, 1], [], []>} : vector<8x256xf32>, vector<256x128xf32>, vector<8x128xf32> -> vector<8x128xf32>
    %c0_15 = arith.constant 0 : index
    %c0_16 = arith.constant 0 : index
    %17 = vector.load %arg7[%c0_15, %c0_16] : memref<1x128xf32, #tpu.memory_space<vmem>>, vector<1x128xf32>
    %18 = vector.broadcast %17 : vector<1x128xf32> to vector<8x128xf32>
    %19 = arith.addf %16, %18 : vector<8x128xf32>
    %20 = math.tanh %19 : vector<8x128xf32>
    %cst_17 = arith.constant 2.000000e+00 : f32
    %21 = vector.broadcast %cst_17 : f32 to vector<8x128xf32>
    %22 = arith.mulf %21, %20 : vector<8x128xf32>
    %c0_18 = arith.constant 0 : index
    %c0_19 = arith.constant 0 : index
    %23 = vector.load %arg8[%c0_18, %c0_19] : memref<8x128xf32, #tpu.memory_space<vmem>>, vector<8x128xf32>
    tpu.vector_store %arg8[%c0_18, %c0_19], %22 {strides = array<i32>} : memref<8x128xf32, #tpu.memory_space<vmem>>, vector<8x128xf32>,
    return
  }
  func.func @transform_0(%arg0: i32) -> (i32, i32) {
    %c0_i32 = arith.constant 0 : i32
    %c0_i32_0 = arith.constant 0 : i32
    return %arg0, %c0_i32 : i32, i32
  }
  func.func @transform_1(%arg0: i32) -> (i32, i32) {
    %c0_i32 = arith.constant 0 : i32
    %c0_i32_0 = arith.constant 0 : i32
    %c0_i32_1 = arith.constant 0 : i32
    return %c0_i32, %c0_i32_0 : i32, i32
  }
  func.func @transform_2(%arg0: i32) -> (i32, i32) {
    %c0_i32 = arith.constant 0 : i32
    %c0_i32_0 = arith.constant 0 : i32
    %c0_i32_1 = arith.constant 0 : i32
    return %c0_i32, %c0_i32_0 : i32, i32
  }
  func.func @transform_3(%arg0: i32) -> (i32, i32) {
    %c0_i32 = arith.constant 0 : i32
    %c0_i32_0 = arith.constant 0 : i32
    %c0_i32_1 = arith.constant 0 : i32
    return %c0_i32, %c0_i32_0 : i32, i32
  }
  func.func @transform_4(%arg0: i32) -> (i32, i32) {
    %c0_i32 = arith.constant 0 : i32
    %c0_i32_0 = arith.constant 0 : i32
    %c0_i32_1 = arith.constant 0 : i32
    return %c0_i32, %c0_i32_0 : i32, i32
  }
  func.func @transform_5(%arg0: i32) -> (i32, i32) {
    %c0_i32 = arith.constant 0 : i32
    %c0_i32_0 = arith.constant 0 : i32
    %c0_i32_1 = arith.constant 0 : i32
    return %c0_i32, %c0_i32_0 : i32, i32
  }
  func.func @transform_6(%arg0: i32) -> (i32, i32) {
    %c0_i32 = arith.constant 0 : i32
    %c0_i32_0 = arith.constant 0 : i32
    %c0_i32_1 = arith.constant 0 : i32
    return %c0_i32, %c0_i32_0 : i32, i32
  }
  func.func @transform_7(%arg0: i32) -> (i32, i32) {
    %c0_i32 = arith.constant 0 : i32
    %c0_i32_0 = arith.constant 0 : i32
    return %arg0, %c0_i32 : i32, i32
  }
}

</mosaic_0001>

<llo_original>
// kernel: tpu_custom_call.1
$region0: #{tpu_custom_call.1}
  #allocation0 [shape = 'u32[]', space=smem, size = 0x4, offset = 0x4, fixed_abs, tag = 'smem constant byte address 0x4 - core index']
  #allocation1 [shape = 'u32[72,128]{1,0:T(1,128)}', space=vmem, size = 0x9000, scoped, tag = 'internal scratch']
  %s0 = inlined_call_operand.hbm [shape: f32[8,16], index: 0, kind: input, shape index: {}]
  %s1 = inlined_call_operand.hbm [shape: f32[16,256], index: 1, kind: input, shape index: {}]
  %s2 = inlined_call_operand.hbm [shape: f32[1,256], index: 2, kind: input, shape index: {}]
  %s3 = inlined_call_operand.hbm [shape: f32[256,256], index: 3, kind: input, shape index: {}]
  %s4 = inlined_call_operand.vmem [shape: f32[1,256], index: 4, kind: input, shape index: {}]
  %s5 = inlined_call_operand.hbm [shape: f32[256,128], index: 5, kind: input, shape index: {}]
  %s6 = inlined_call_operand.vmem [shape: f32[1,128], index: 6, kind: input, shape index: {}]
  %s7 = inlined_call_operand.hbm [shape: f32[8,128], index: 7, kind: output, shape index: {}]
  %s8 = sld [smem:[#allocation0]]
  $region58: #{tpu_custom_call.1} parent=0
    _
  %s10 = ssub.s32 1, %s8
  %s11 = scalar_select 0, %s10, %s8
  $region1: #{tpu_custom_call.1} parent=0
    #allocation2 [shape = 'u8[4096]{0}', space=vmem, size = 0x1000, scoped, tag = 'input window, operand 0, single buffered']
    #allocation3 [shape = 's32[1]{0}', space=sflag, size = 0x4, scoped, tag = 'scoped memory for tpu_custom_call.1']
    #allocation4 [shape = 's32[1]{0}', space=sflag, size = 0x4, scoped, tag = 'scoped memory for tpu_custom_call.1']
    #allocation5 [shape = 'u8[16384]{0}', space=vmem, size = 0x4000, scoped, tag = 'input window, operand 1, single buffered']
    #allocation6 [shape = 's32[1]{0}', space=sflag, size = 0x4, scoped, tag = 'scoped memory for tpu_custom_call.1']
    #allocation7 [shape = 'u8[1024]{0}', space=vmem, size = 0x400, scoped, tag = 'input window, operand 2, single buffered']
    #allocation8 [shape = 'u8[262144]{0}', space=vmem, size = 0x40000, scoped, tag = 'input window, operand 3, single buffered']
    #allocation9 [shape = 's32[1]{0}', space=sflag, size = 0x4, scoped, tag = 'scoped memory for tpu_custom_call.1']
    #allocation10 [shape = 'u8[131072]{0}', space=vmem, size = 0x20000, scoped, tag = 'input window, operand 5, single buffered']
    #allocation11 [shape = 'u8[4096]{0}', space=vmem, size = 0x1000, scoped, tag = 'output window, operand 0, single buffered']
    %12 = vsyncpa [#allocation3], 0
    %13 = vsyncpa [#allocation6], 0
    %14 = vsyncpa [#allocation9], 0
    %15 = vsyncpa [#allocation4], 0
    // Predicated region
    $region2: #{tpu_custom_call.1} parent=1 // pred_check
      _
    $region3: #{tpu_custom_call.1} parent=1 // pred_check_branch
      %17 = sbr.rel (0) target = $region5
    $region4: #{tpu_custom_call.1} parent=1 // pred_region
      %19 = vsyncadd [#allocation3], 0
      %s21 = sshll.u32 %s0, 4
      %s22 = int_to_ptr.hbm [resolvable:$true] %s21
      %s23 = sshll.u32 [#allocation2], 4
      %s24 = int_to_ptr.vmem [resolvable:$true] %s23
      %26 = dma.hbm_to_vmem [thread:$0]  %s22, 128, %s24, [#allocation3]
    $region5: #{tpu_custom_call.1} parent=1 // pred_fallthru
      _
    // Predicated region
    $region6: #{tpu_custom_call.1} parent=1 // pred_check
      _
    $region7: #{tpu_custom_call.1} parent=1 // pred_check_branch
      %28 = sbr.rel (0) target = $region9
    $region8: #{tpu_custom_call.1} parent=1 // pred_region
      %30 = vsyncadd [#allocation6], 0
      %s31 = sshll.u32 %s1, 4
      %s32 = int_to_ptr.hbm [resolvable:$true] %s31
      %s33 = sshll.u32 [#allocation5], 4
      %s34 = int_to_ptr.vmem [resolvable:$true] %s33
      %39 = dma.hbm_to_vmem [thread:$0]  %s32, 512, %s34, [#allocation6], 256, 256, 16
    $region9: #{tpu_custom_call.1} parent=1 // pred_fallthru
      _
    // Predicated region
    $region10: #{tpu_custom_call.1} parent=1 // pred_check
      _
    $region11: #{tpu_custom_call.1} parent=1 // pred_check_branch
      %41 = sbr.rel (0) target = $region13
    $region12: #{tpu_custom_call.1} parent=1 // pred_region
      %43 = vsyncadd [#allocation6], 0
      %s45 = sshll.u32 %s2, 4
      %s46 = int_to_ptr.hbm [resolvable:$true] %s45
      %s47 = sshll.u32 [#allocation7], 4
      %s48 = int_to_ptr.vmem [resolvable:$true] %s47
      %50 = dma.hbm_to_vmem [thread:$0]  %s46, 32, %s48, [#allocation6]
    $region13: #{tpu_custom_call.1} parent=1 // pred_fallthru
      _
    // Predicated region
    $region14: #{tpu_custom_call.1} parent=1 // pred_check
      _
    $region15: #{tpu_custom_call.1} parent=1 // pred_check_branch
      %52 = sbr.rel (0) target = $region17
    $region16: #{tpu_custom_call.1} parent=1 // pred_region
      %54 = vsyncadd [#allocation9], 0
      %s55 = sshll.u32 %s3, 4
      %s56 = int_to_ptr.hbm [resolvable:$true] %s55
      %s57 = sshll.u32 [#allocation8], 4
      %s58 = int_to_ptr.vmem [resolvable:$true] %s57
      %63 = dma.hbm_to_vmem [thread:$0]  %s56, 8192, %s58, [#allocation9], 256, 256, 16
    $region17: #{tpu_custom_call.1} parent=1 // pred_fallthru
      _
    // Predicated region
    $region18: #{tpu_custom_call.1} parent=1 // pred_check
      _
    $region19: #{tpu_custom_call.1} parent=1 // pred_check_branch
      %65 = sbr.rel (0) target = $region21
    $region20: #{tpu_custom_call.1} parent=1 // pred_region
      _
    $region21: #{tpu_custom_call.1} parent=1 // pred_fallthru
      _
    // Predicated region
    $region22: #{tpu_custom_call.1} parent=1 // pred_check
      _
    $region23: #{tpu_custom_call.1} parent=1 // pred_check_branch
      %67 = sbr.rel (0) target = $region25
    $region24: #{tpu_custom_call.1} parent=1 // pred_region
      %69 = vsyncadd [#allocation9], 0
      %s70 = sshll.u32 %s5, 4
      %s71 = int_to_ptr.hbm [resolvable:$true] %s70
      %s72 = sshll.u32 [#allocation10], 4
      %s73 = int_to_ptr.vmem [resolvable:$true] %s72
      %78 = dma.hbm_to_vmem [thread:$0]  %s71, 4096, %s73, [#allocation9], 128, 128, 8
    $region25: #{tpu_custom_call.1} parent=1 // pred_fallthru
      _
    // Predicated region
    $region26: #{tpu_custom_call.1} parent=1 // pred_check
      _
    $region27: #{tpu_custom_call.1} parent=1 // pred_check_branch
      %80 = sbr.rel (0) target = $region29
    $region28: #{tpu_custom_call.1} parent=1 // pred_region
      _
    $region29: #{tpu_custom_call.1} parent=1 // pred_fallthru
      _
    // Predicated region
    $region30: #{tpu_custom_call.1} parent=1 // pred_check
      _
    $region31: #{tpu_custom_call.1} parent=1 // pred_check_branch
      %82 = sbr.rel (0) target = $region33
    $region32: #{tpu_custom_call.1} parent=1 // pred_region
      %84 = dma.done [#allocation3], 128
    $region33: #{tpu_custom_call.1} parent=1 // pred_fallthru
      _
    // Predicated region
    $region34: #{tpu_custom_call.1} parent=1 // pred_check
      _
    $region35: #{tpu_custom_call.1} parent=1 // pred_check_branch
      %86 = sbr.rel (0) target = $region37
    $region36: #{tpu_custom_call.1} parent=1 // pred_region
      %88 = dma.done [#allocation6], 512
    $region37: #{tpu_custom_call.1} parent=1 // pred_fallthru
      _
    // Predicated region
    $region38: #{tpu_custom_call.1} parent=1 // pred_check
      _
    $region39: #{tpu_custom_call.1} parent=1 // pred_check_branch
      %90 = sbr.rel (0) target = $region41
    $region40: #{tpu_custom_call.1} parent=1 // pred_region
      %92 = dma.done [#allocation6], 32
    $region41: #{tpu_custom_call.1} parent=1 // pred_fallthru
      _
    // Predicated region
    $region42: #{tpu_custom_call.1} parent=1 // pred_check
      _
    $region43: #{tpu_custom_call.1} parent=1 // pred_check_branch
      %94 = sbr.rel (0) target = $region45
    $region44: #{tpu_custom_call.1} parent=1 // pred_region
      %96 = dma.done [#allocation9], 8192
    $region45: #{tpu_custom_call.1} parent=1 // pred_fallthru
      _
    // Predicated region
    $region46: #{tpu_custom_call.1} parent=1 // pred_check
      _
    $region47: #{tpu_custom_call.1} parent=1 // pred_check_branch
      %98 = sbr.rel (0) target = $region49
    $region48: #{tpu_custom_call.1} parent=1 // pred_region
      %100 = dma.done [#allocation9], 4096
    $region49: #{tpu_custom_call.1} parent=1 // pred_fallthru
      _
    %v101 = vld [vmem:[#allocation2] sm:$0xff]
    %v102 = vld [vmem:[#allocation5] sm:$0xff]
    %v103 = vld [vmem:[#allocation5 + $0x8] sm:$0xff]
    %v104 = vld [vmem:[#allocation5 + $0x10] sm:$0xff]
    %v105 = vld [vmem:[#allocation5 + $0x18] sm:$0xff]
    %v106 = vld [vmem:[#allocation7] sm:$0x3]
    %v108 = vperm.slane %v106, 0
    %v109 = vperm.slane %v106, 1
    %vm112 = vcmask 130048
    %v114 = vsel %vm112, %v101, 0
    %116 = vmatpush.msra.mxu0 0.0
    %117 = vmatpush.msra.mxu0 0.0
    %118 = vmatpush.msra.mxu0 0.0
    %119 = vmatpush.msra.mxu0 0.0
    %120 = vmatpush.msra.mxu0 0.0
    %121 = vmatpush.msra.mxu0 0.0
    %122 = vmatpush.msra.mxu0 0.0
    %123 = vmatpush.msra.mxu0 0.0
    %124 = vmatpush.msra.mxu0 0.0
    %125 = vmatpush.msra.mxu0 0.0
    %126 = vmatpush.msra.mxu0 0.0
    %127 = vmatpush.msra.mxu0 0.0
    %128 = vmatpush.msra.mxu0 0.0
    %129 = vmatpush.msra.mxu0 0.0
    %130 = vmatpush.msra.mxu0 %v104
    %131 = vmatpush.msra.mxu0 %v102
    %132 = vmatmul.f32.gmra.mxu0 %v114
    %v133 = vpop.f32.mrf.mxu0
    %v134 = vadd.f32 %v108, %v133
    %135 = vdwg.mxu0
    %136 = vmatpush.msra.mxu0 0.0
    %137 = vmatpush.msra.mxu0 0.0
    %138 = vmatpush.msra.mxu0 0.0
    %139 = vmatpush.msra.mxu0 0.0
    %140 = vmatpush.msra.mxu0 0.0
    %141 = vmatpush.msra.mxu0 0.0
    %142 = vmatpush.msra.mxu0 0.0
    %143 = vmatpush.msra.mxu0 0.0
    %144 = vmatpush.msra.mxu0 0.0
    %145 = vmatpush.msra.mxu0 0.0
    %146 = vmatpush.msra.mxu0 0.0
    %147 = vmatpush.msra.mxu0 0.0
    %148 = vmatpush.msra.mxu0 0.0
    %149 = vmatpush.msra.mxu0 0.0
    %150 = vmatpush.msra.mxu0 %v105
    %151 = vmatpush.msra.mxu0 %v103
    %152 = vmatmul.f32.gmra.mxu0 %v114
    %v153 = vpop.f32.mrf.mxu0
    %v154 = vadd.f32 %v109, %v153
    %155 = vdwg.mxu0
    %v156 = vmax.f32 %v134, 0.0
    %v157 = vmax.f32 %v154, 0.0
    %v158 = vld [vmem:[#allocation8] sm:$0xff]
    %v159 = vld [vmem:[#allocation8 + $0x8] sm:$0xff]
    %v160 = vld [vmem:[#allocation8 + $0x10] sm:$0xff]
    %v161 = vld [vmem:[#allocation8 + $0x18] sm:$0xff]
    %v162 = vld [vmem:[#allocation8 + $0x20] sm:$0xff]
    %v163 = vld [vmem:[#allocation8 + $0x28] sm:$0xff]
    %v164 = vld [vmem:[#allocation8 + $0x30] sm:$0xff]
    %v165 = vld [vmem:[#allocation8 + $0x38] sm:$0xff]
    %v166 = vld [vmem:[#allocation8 + $0x40] sm:$0xff]
    %v167 = vld [vmem:[#allocation8 + $0x48] sm:$0xff]
    %v168 = vld [vmem:[#allocation8 + $0x50] sm:$0xff]
    %v169 = vld [vmem:[#allocation8 + $0x58] sm:$0xff]
    %v170 = vld [vmem:[#allocation8 + $0x60] sm:$0xff]
    %v171 = vld [vmem:[#allocation8 + $0x68] sm:$0xff]
    %v172 = vld [vmem:[#allocation8 + $0x70] sm:$0xff]
    %v173 = vld [vmem:[#allocation8 + $0x78] sm:$0xff]
    %v174 = vld [vmem:[#allocation8 + $0x80] sm:$0xff]
    %v175 = vld [vmem:[#allocation8 + $0x88] sm:$0xff]
    %v176 = vld [vmem:[#allocation8 + $0x90] sm:$0xff]
    %v177 = vld [vmem:[#allocation8 + $0x98] sm:$0xff]
    %v178 = vld [vmem:[#allocation8 + $0xa0] sm:$0xff]
    %v179 = vld [vmem:[#allocation8 + $0xa8] sm:$0xff]
    %v180 = vld [vmem:[#allocation8 + $0xb0] sm:$0xff]
    %v181 = vld [vmem:[#allocation8 + $0xb8] sm:$0xff]
    %v182 = vld [vmem:[#allocation8 + $0xc0] sm:$0xff]
    %v183 = vld [vmem:[#allocation8 + $0xc8] sm:$0xff]
    %v184 = vld [vmem:[#allocation8 + $0xd0] sm:$0xff]
    %v185 = vld [vmem:[#allocation8 + $0xd8] sm:$0xff]
    %v186 = vld [vmem:[#allocation8 + $0xe0] sm:$0xff]
    %v187 = vld [vmem:[#allocation8 + $0xe8] sm:$0xff]
    %v188 = vld [vmem:[#allocation8 + $0xf0] sm:$0xff]
    %v189 = vld [vmem:[#allocation8 + $0xf8] sm:$0xff]
    %v190 = vld [vmem:[#allocation8 + $0x100] sm:$0xff]
    %v191 = vld [vmem:[#allocation8 + $0x108] sm:$0xff]
    %v192 = vld [vmem:[#allocation8 + $0x110] sm:$0xff]
    %v193 = vld [vmem:[#allocation8 + $0x118] sm:$0xff]
    %v194 = vld [vmem:[#allocation8 + $0x120] sm:$0xff]
    %v195 = vld [vmem:[#allocation8 + $0x128] sm:$0xff]
    %v196 = vld [vmem:[#allocation8 + $0x130] sm:$0xff]
    %v197 = vld [vmem:[#allocation8 + $0x138] sm:$0xff]
    %v198 = vld [vmem:[#allocation8 + $0x140] sm:$0xff]
    %v199 = vld [vmem:[#allocation8 + $0x148] sm:$0xff]
    %v200 = vld [vmem:[#allocation8 + $0x150] sm:$0xff]
    %v201 = vld [vmem:[#allocation8 + $0x158] sm:$0xff]
    %v202 = vld [vmem:[#allocation8 + $0x160] sm:$0xff]
    %v203 = vld [vmem:[#allocation8 + $0x168] sm:$0xff]
    %v204 = vld [vmem:[#allocation8 + $0x170] sm:$0xff]
    %v205 = vld [vmem:[#allocation8 + $0x178] sm:$0xff]
    %v206 = vld [vmem:[#allocation8 + $0x180] sm:$0xff]
    %v207 = vld [vmem:[#allocation8 + $0x188] sm:$0xff]
    %v208 = vld [vmem:[#allocation8 + $0x190] sm:$0xff]
    %v209 = vld [vmem:[#allocation8 + $0x198] sm:$0xff]
    %v210 = vld [vmem:[#allocation8 + $0x1a0] sm:$0xff]
    %v211 = vld [vmem:[#allocation8 + $0x1a8] sm:$0xff]
    %v212 = vld [vmem:[#allocation8 + $0x1b0] sm:$0xff]
    %v213 = vld [vmem:[#allocation8 + $0x1b8] sm:$0xff]
    %v214 = vld [vmem:[#allocation8 + $0x1c0] sm:$0xff]
    %v215 = vld [vmem:[#allocation8 + $0x1c8] sm:$0xff]
    %v216 = vld [vmem:[#allocation8 + $0x1d0] sm:$0xff]
    %v217 = vld [vmem:[#allocation8 + $0x1d8] sm:$0xff]
    %v218 = vld [vmem:[#allocation8 + $0x1e0] sm:$0xff]
    %v219 = vld [vmem:[#allocation8 + $0x1e8] sm:$0xff]
    %v220 = vld [vmem:[#allocation8 + $0x1f0] sm:$0xff]
    %v221 = vld [vmem:[#allocation8 + $0x1f8] sm:$0xff]
    %v222 = vld [vmem:[%s4] sm:$0x3]
    %v224 = vperm.slane %v222, 0
    %v225 = vperm.slane %v222, 1
    %228 = vmatpush.msra.mxu0 %v188
    %229 = vmatpush.msra.mxu0 %v186
    %230 = vmatpush.msra.mxu0 %v184
    %231 = vmatpush.msra.mxu0 %v182
    %232 = vmatpush.msra.mxu0 %v180
    %233 = vmatpush.msra.mxu0 %v178
    %234 = vmatpush.msra.mxu0 %v176
    %235 = vmatpush.msra.mxu0 %v174
    %236 = vmatpush.msra.mxu0 %v172
    %237 = vmatpush.msra.mxu0 %v170
    %238 = vmatpush.msra.mxu0 %v168
    %239 = vmatpush.msra.mxu0 %v166
    %240 = vmatpush.msra.mxu0 %v164
    %241 = vmatpush.msra.mxu0 %v162
    %242 = vmatpush.msra.mxu0 %v160
    %243 = vmatpush.msra.mxu0 %v158
    %244 = vmatmul.f32.gmra.mxu0 %v156
    %v245 = vpop.f32.mrf.mxu0
    %v246 = vadd.f32 %v224, %v245
    %247 = vdwg.mxu0
    %248 = vmatpush.msra.mxu0 %v220
    %249 = vmatpush.msra.mxu0 %v218
    %250 = vmatpush.msra.mxu0 %v216
    %251 = vmatpush.msra.mxu0 %v214
    %252 = vmatpush.msra.mxu0 %v212
    %253 = vmatpush.msra.mxu0 %v210
    %254 = vmatpush.msra.mxu0 %v208
    %255 = vmatpush.msra.mxu0 %v206
    %256 = vmatpush.msra.mxu0 %v204
    %257 = vmatpush.msra.mxu0 %v202
    %258 = vmatpush.msra.mxu0 %v200
    %259 = vmatpush.msra.mxu0 %v198
    %260 = vmatpush.msra.mxu0 %v196
    %261 = vmatpush.msra.mxu0 %v194
    %262 = vmatpush.msra.mxu0 %v192
    %263 = vmatpush.msra.mxu0 %v190
    %264 = vmatmul.f32.gmra.mxu0 %v157
    %v265 = vpop.f32.mrf.mxu0
    %v266 = vadd.f32 %v246, %v265
    %267 = vdwg.mxu0
    %268 = vmatpush.msra.mxu0 %v189
    %269 = vmatpush.msra.mxu0 %v187
    %270 = vmatpush.msra.mxu0 %v185
    %271 = vmatpush.msra.mxu0 %v183
    %272 = vmatpush.msra.mxu0 %v181
    %273 = vmatpush.msra.mxu0 %v179
    %274 = vmatpush.msra.mxu0 %v177
    %275 = vmatpush.msra.mxu0 %v175
    %276 = vmatpush.msra.mxu0 %v173
    %277 = vmatpush.msra.mxu0 %v171
    %278 = vmatpush.msra.mxu0 %v169
    %279 = vmatpush.msra.mxu0 %v167
    %280 = vmatpush.msra.mxu0 %v165
    %281 = vmatpush.msra.mxu0 %v163
    %282 = vmatpush.msra.mxu0 %v161
    %283 = vmatpush.msra.mxu0 %v159
    %284 = vmatmul.f32.gmra.mxu0 %v156
    %v285 = vpop.f32.mrf.mxu0
    %v286 = vadd.f32 %v225, %v285
    %287 = vdwg.mxu0
    %288 = vmatpush.msra.mxu0 %v221
    %289 = vmatpush.msra.mxu0 %v219
    %290 = vmatpush.msra.mxu0 %v217
    %291 = vmatpush.msra.mxu0 %v215
    %292 = vmatpush.msra.mxu0 %v213
    %293 = vmatpush.msra.mxu0 %v211
    %294 = vmatpush.msra.mxu0 %v209
    %295 = vmatpush.msra.mxu0 %v207
    %296 = vmatpush.msra.mxu0 %v205
    %297 = vmatpush.msra.mxu0 %v203
    %298 = vmatpush.msra.mxu0 %v201
    %299 = vmatpush.msra.mxu0 %v199
    %300 = vmatpush.msra.mxu0 %v197
    %301 = vmatpush.msra.mxu0 %v195
    %302 = vmatpush.msra.mxu0 %v193
    %303 = vmatpush.msra.mxu0 %v191
    %304 = vmatmul.f32.gmra.mxu0 %v157
    %v305 = vpop.f32.mrf.mxu0
    %v306 = vadd.f32 %v286, %v305
    %307 = vdwg.mxu0
    %v308 = vmax.f32 %v266, 0.0
    %v309 = vmax.f32 %v306, 0.0
    %v310 = vld [vmem:[#allocation10] sm:$0xff]
    %v311 = vld [vmem:[#allocation10 + $0x8] sm:$0xff]
    %v312 = vld [vmem:[#allocation10 + $0x10] sm:$0xff]
    %v313 = vld [vmem:[#allocation10 + $0x18] sm:$0xff]
    %v314 = vld [vmem:[#allocation10 + $0x20] sm:$0xff]
    %v315 = vld [vmem:[#allocation10 + $0x28] sm:$0xff]
    %v316 = vld [vmem:[#allocation10 + $0x30] sm:$0xff]
    %v317 = vld [vmem:[#allocation10 + $0x38] sm:$0xff]
    %v318 = vld [vmem:[#allocation10 + $0x40] sm:$0xff]
    %v319 = vld [vmem:[#allocation10 + $0x48] sm:$0xff]
    %v320 = vld [vmem:[#allocation10 + $0x50] sm:$0xff]
    %v321 = vld [vmem:[#allocation10 + $0x58] sm:$0xff]
    %v322 = vld [vmem:[#allocation10 + $0x60] sm:$0xff]
    %v323 = vld [vmem:[#allocation10 + $0x68] sm:$0xff]
    %v324 = vld [vmem:[#allocation10 + $0x70] sm:$0xff]
    %v325 = vld [vmem:[#allocation10 + $0x78] sm:$0xff]
    %v326 = vld [vmem:[#allocation10 + $0x80] sm:$0xff]
    %v327 = vld [vmem:[#allocation10 + $0x88] sm:$0xff]
    %v328 = vld [vmem:[#allocation10 + $0x90] sm:$0xff]
    %v329 = vld [vmem:[#allocation10 + $0x98] sm:$0xff]
    %v330 = vld [vmem:[#allocation10 + $0xa0] sm:$0xff]
    %v331 = vld [vmem:[#allocation10 + $0xa8] sm:$0xff]
    %v332 = vld [vmem:[#allocation10 + $0xb0] sm:$0xff]
    %v333 = vld [vmem:[#allocation10 + $0xb8] sm:$0xff]
    %v334 = vld [vmem:[#allocation10 + $0xc0] sm:$0xff]
    %v335 = vld [vmem:[#allocation10 + $0xc8] sm:$0xff]
    %v336 = vld [vmem:[#allocation10 + $0xd0] sm:$0xff]
    %v337 = vld [vmem:[#allocation10 + $0xd8] sm:$0xff]
    %v338 = vld [vmem:[#allocation10 + $0xe0] sm:$0xff]
    %v339 = vld [vmem:[#allocation10 + $0xe8] sm:$0xff]
    %v340 = vld [vmem:[#allocation10 + $0xf0] sm:$0xff]
    %v341 = vld [vmem:[#allocation10 + $0xf8] sm:$0xff]
    %v342 = vld [vmem:[%s6] sm:$0x1]
    %v344 = vperm.slane %v342, 0
    %346 = vmatpush.msra.mxu0 %v325
    %347 = vmatpush.msra.mxu0 %v324
    %348 = vmatpush.msra.mxu0 %v323
    %349 = vmatpush.msra.mxu0 %v322
    %350 = vmatpush.msra.mxu0 %v321
    %351 = vmatpush.msra.mxu0 %v320
    %352 = vmatpush.msra.mxu0 %v319
    %353 = vmatpush.msra.mxu0 %v318
    %354 = vmatpush.msra.mxu0 %v317
    %355 = vmatpush.msra.mxu0 %v316
    %356 = vmatpush.msra.mxu0 %v315
    %357 = vmatpush.msra.mxu0 %v314
    %358 = vmatpush.msra.mxu0 %v313
    %359 = vmatpush.msra.mxu0 %v312
    %360 = vmatpush.msra.mxu0 %v311
    %361 = vmatpush.msra.mxu0 %v310
    %362 = vmatmul.f32.gmra.mxu0 %v308
    %v363 = vpop.f32.mrf.mxu0
    %v364 = vadd.f32 %v344, %v363
    %365 = vdwg.mxu0
    %366 = vmatpush.msra.mxu0 %v341
    %367 = vmatpush.msra.mxu0 %v340
    %368 = vmatpush.msra.mxu0 %v339
    %369 = vmatpush.msra.mxu0 %v338
    %370 = vmatpush.msra.mxu0 %v337
    %371 = vmatpush.msra.mxu0 %v336
    %372 = vmatpush.msra.mxu0 %v335
    %373 = vmatpush.msra.mxu0 %v334
    %374 = vmatpush.msra.mxu0 %v333
    %375 = vmatpush.msra.mxu0 %v332
    %376 = vmatpush.msra.mxu0 %v331
    %377 = vmatpush.msra.mxu0 %v330
    %378 = vmatpush.msra.mxu0 %v329
    %379 = vmatpush.msra.mxu0 %v328
    %380 = vmatpush.msra.mxu0 %v327
    %381 = vmatpush.msra.mxu0 %v326
    %382 = vmatmul.f32.gmra.mxu0 %v309
    %v383 = vpop.f32.mrf.mxu0
    %v384 = vadd.f32 %v364, %v383
    %385 = vdwg.mxu0
    %v386 = vtanh.pop %v384
    %v387 = vmul.f32 %v386, 2.0
    %388 = vst [vmem:[#allocation11] sm:$0xff] %v387
    // Predicated region
    $region50: #{tpu_custom_call.1} parent=1 // pred_check
      _
    $region51: #{tpu_custom_call.1} parent=1 // pred_check_branch
      %390 = sbr.rel (0) target = $region53
    $region52: #{tpu_custom_call.1} parent=1 // pred_region
      %392 = vsyncadd [#allocation4], 0
      %s394 = sshll.u32 [#allocation11], 4
      %s395 = int_to_ptr.vmem [resolvable:$true] %s394
      %s396 = sshll.u32 %s7, 4
      %s397 = int_to_ptr.hbm [resolvable:$true] %s396
      %399 = dma.vmem_to_hbm [thread:$0]  %s395, 128, %s397, [#allocation4]
    $region53: #{tpu_custom_call.1} parent=1 // pred_fallthru
      _
    // Predicated region
    $region54: #{tpu_custom_call.1} parent=1 // pred_check
      _
    $region55: #{tpu_custom_call.1} parent=1 // pred_check_branch
      %401 = sbr.rel (0) target = $region57
    $region56: #{tpu_custom_call.1} parent=1 // pred_region
      %403 = dma.done [#allocation4], 128
    $region57: #{tpu_custom_call.1} parent=1 // pred_fallthru
      _
    %404 = vsyncpa [#allocation3], 1
    %405 = vsyncpa [#allocation6], 1
    %406 = vsyncpa [#allocation9], 1
    %407 = vsyncpa [#allocation4], 1

</llo_original>
